<compile_context>
chip_gen: v5e
topology: v5e:2x2
jax: 0.10.0
libtpu: 0.0.40
codegen_flags: <defaults>
</compile_context>

<pallas_src>
import functools

import jax
import jax.numpy as jnp
from jax.experimental import pallas as pl
from jax.experimental.pallas import tpu as pltpu


def _round_up(x: int, m: int) -> int:
    return ((x + m - 1) // m) * m


def _largest_tile(total: int, requested: int, granule: int = 128) -> int:
    """Largest `granule`-multiple divisor of `total` that is <= `requested`.

    `total` must already be a multiple of `granule` (we pad d_ff to 128).
    """
    requested = max(granule, min(requested, total))
    best = granule
    t = granule
    while t <= requested:
        if total % t == 0:
            best = t
        t += granule
    return best


# --------------------------------------------------------------------------- #
# Kernels
# --------------------------------------------------------------------------- #
def _ffn_resident_kernel(x_ref, w1_ref, b1_ref, w2_ref, b2_ref, o_ref, *,
                         compute_dtype):
    """Fast path: full (padded) d_ff resident in VMEM; grid = (m_tiles,)."""
    x = x_ref[...].astype(compute_dtype)
    h = jnp.dot(x, w1_ref[...], preferred_element_type=jnp.float32)
    h = jnp.maximum(h + b1_ref[...], 0.0)
    # dropout(p) in eval mode == identity.
    y = jnp.dot(h.astype(compute_dtype), w2_ref[...],
                preferred_element_type=jnp.float32)
    o_ref[...] = (y + b2_ref[...]).astype(o_ref.dtype)


def _ffn_reduce_kernel(x_ref, w1_ref, b1_ref, w2_ref, b2_ref, o_ref, acc_ref, *,
                       compute_dtype):
    """Reduction path over d_ff chunks; grid = (m_tiles, ff_tiles)."""
    k = pl.program_id(1)

    x = x_ref[...].astype(compute_dtype)
    h = jnp.dot(x, w1_ref[...], preferred_element_type=jnp.float32)
    h = jnp.maximum(h + b1_ref[...], 0.0)
    # dropout(p) in eval mode == identity.
    p = jnp.dot(h.astype(compute_dtype), w2_ref[...],
                preferred_element_type=jnp.float32)

    @pl.when(k == 0)
    def _first():
        # Straight write (no zero-init + read-modify-write); fold b2 in once.
        acc_ref[...] = p + b2_ref[...]

    @pl.when(k > 0)
    def _rest():
        acc_ref[...] += p

    @pl.when(k == pl.num_programs(1) - 1)
    def _finalize():
        o_ref[...] = acc_ref[...].astype(o_ref.dtype)


# --------------------------------------------------------------------------- #
# Wrapper
# --------------------------------------------------------------------------- #
def positionwise_feed_forward(x, w1, b1, w2, b2, *,
                              tile_m: int | None = None,
                              tile_ff: int | None = None,
                              mxu_dtype=None):
    """x: [B, S, d_model]; w1: [d_model, d_ff]; w2: [d_ff, d_model]."""
    B, S, d_model = x.shape
    d_ff = w1.shape[1]
    out_dtype = x.dtype
    M = B * S

    # bf16 MXU operands by default for f32 inputs (f32 accumulation kept).
    if mxu_dtype is None:
        compute_dtype = jnp.bfloat16 if x.dtype == jnp.float32 else x.dtype
    else:
        compute_dtype = mxu_dtype

    x_isz = jnp.dtype(x.dtype).itemsize
    w_isz = jnp.dtype(compute_dtype).itemsize
    o_isz = jnp.dtype(out_dtype).itemsize

    # ---- per-chip VMEM budget (v7x has only 64 MiB / TC) --------------------
    try:
        vmem_cap = int(pltpu.get_tpu_info().vmem_capacity_bytes)
    except Exception:
        vmem_cap = 64 << 20  # conservative fallback
    budget = max(16 << 20, min(int(vmem_cap * 0.72), vmem_cap - (16 << 20)))

    # ---- lane-dense / MXU-friendly padding ----------------------------------
    d_model_p = _round_up(d_model, 128)
    d_ff_p = _round_up(d_ff, 128)

    # ---- tile_m --------------------------------------------------------------
    if tile_m is None:
        # 128-MiB parts (v5e/v6e): larger M tile amortizes re-streamed weights
        # past the HBM roofline.  64-MiB parts (v7x): 512 is already
        # compute-bound and VMEM is scarce.
        tile_m = 1024 if vmem_cap >= (100 << 20) else 512
    tile_m = max(8, min(_round_up(tile_m, 8), _round_up(M, 8)))
    # Megacore: keep >= 2 tiles on the "parallel" M axis when possible.
    if pl.cdiv(_round_up(M, 8), tile_m) < 2 and tile_m >= 16:
        tile_m = _round_up(tile_m // 2, 8)

    # ---- working-set estimators (double-buffered streams + temporaries) -----
    def reduce_ws(tm, tff):
        return (2 * tm * d_model_p * x_isz        # x tiles
                + 2 * d_model_p * tff * w_isz     # W1 chunk
                + 2 * tff * 4                     # b1 chunk
                + 2 * tff * d_model_p * w_isz     # W2 chunk
                + 2 * d_model_p * 4               # b2
                + 2 * tm * d_model_p * o_isz      # out tiles
                + tm * d_model_p * 4              # f32 accumulator scratch
                + tm * tff * (4 + w_isz)          # h (f32) + cast temporary
                + tm * d_model_p * 4)             # per-step product temporary

    def resident_ws(tm):
        return (2 * tm * d_model_p * x_isz
                + 2 * d_model_p * d_ff_p * w_isz  # W1 (resident)
                + 2 * d_ff_p * 4
                + 2 * d_ff_p * d_model_p * w_isz  # W2 (resident)
                + 2 * d_model_p * 4
                + 2 * tm * d_model_p * o_isz
                + tm * d_ff_p * (4 + w_isz)       # h temporaries
                + tm * d_model_p * 4)             # y temporary

    # ---- tile_ff: prefer resident weights, else largest fitting 128-chunk ---
    if tile_ff is None:
        if resident_ws(tile_m) <= budget:
            tile_ff = d_ff_p                       # fast path: weights resident
        else:
            tile_ff = _largest_tile(d_ff_p, 512)
            while (tile_ff > 128 and tile_ff % 256 == 0
                   and reduce_ws(tile_m, tile_ff) > budget):
                tile_ff //= 2
    else:
        tile_ff = _largest_tile(d_ff_p, tile_ff)

    fast_path = tile_ff >= d_ff_p

    def current_ws(tm):
        return resident_ws(tm) if fast_path else reduce_ws(tm, tile_ff)

    while current_ws(tile_m) > budget and tile_m > 64:
        tile_m = max(64, _round_up(tile_m // 2, 8))

    M_pad = _round_up(M, tile_m)
    num_m = M_pad // tile_m
    num_k = 1 if fast_path else d_ff_p // tile_ff

    # ---- operand preparation (x stays in its stored dtype; cast in-kernel) --
    x2d = x.reshape(M, d_model)
    if M_pad != M or d_model_p != d_model:
        x2d = jnp.pad(x2d, ((0, M_pad - M), (0, d_model_p - d_model)))

    w1c = w1
    b1c = b1.reshape(1, d_ff)
    w2c = w2
    b2c = b2.reshape(1, d_model)
    if d_model_p != d_model or d_ff_p != d_ff:
        w1c = jnp.pad(w1c, ((0, d_model_p - d_model), (0, d_ff_p - d_ff)))
        b1c = jnp.pad(b1c, ((0, 0), (0, d_ff_p - d_ff)))
        w2c = jnp.pad(w2c, ((0, d_ff_p - d_ff), (0, d_model_p - d_model)))
        b2c = jnp.pad(b2c, ((0, 0), (0, d_model_p - d_model)))
    w1c = w1c.astype(compute_dtype)
    w2c = w2c.astype(compute_dtype)
    b1c = b1c.astype(jnp.float32)
    b2c = b2c.astype(jnp.float32)

    # ---- explicit VMEM limit, clamped to the chip's physical capacity -------
    vmem_limit = int(current_ws(tile_m) * 1.4) + (4 << 20)
    vmem_limit = max(vmem_limit, 32 << 20)
    vmem_limit = min(vmem_limit, vmem_cap - (12 << 20))

    # ---- cost estimate (weights re-streamed num_m times on reduce path) -----
    flops = 4 * M_pad * d_model_p * d_ff_p
    weight_streams = 1 if fast_path else num_m
    bytes_accessed = (
        M_pad * d_model_p * x_isz
        + weight_streams * 2 * d_model_p * d_ff_p * w_isz
        + d_ff_p * 4 + d_model_p * 4
        + M_pad * d_model_p * o_isz)
    cost = pl.CostEstimate(flops=flops, transcendentals=0,
                           bytes_accessed=bytes_accessed)

    if fast_path:
        kernel = functools.partial(_ffn_resident_kernel,
                                   compute_dtype=compute_dtype)
        grid = (num_m,)
        in_specs = [
            pl.BlockSpec((tile_m, d_model_p), lambda i: (i, 0)),     # x tile
            pl.BlockSpec((d_model_p, d_ff_p), lambda i: (0, 0)),     # W1 (resident)
            pl.BlockSpec((1, d_ff_p), lambda i: (0, 0)),             # b1
            pl.BlockSpec((d_ff_p, d_model_p), lambda i: (0, 0)),     # W2 (resident)
            pl.BlockSpec((1, d_model_p), lambda i: (0, 0)),          # b2
        ]
        out_specs = pl.BlockSpec((tile_m, d_model_p), lambda i: (i, 0))
        scratch_shapes = ()
        dim_sem = ("parallel",)
    else:
        kernel = functools.partial(_ffn_reduce_kernel,
                                   compute_dtype=compute_dtype)
        grid = (num_m, num_k)
        in_specs = [
            pl.BlockSpec((tile_m, d_model_p), lambda i, k: (i, 0)),  # x tile
            pl.BlockSpec((d_model_p, tile_ff), lambda i, k: (0, k)), # W1 chunk
            pl.BlockSpec((1, tile_ff), lambda i, k: (0, k)),         # b1 chunk
            pl.BlockSpec((tile_ff, d_model_p), lambda i, k: (k, 0)), # W2 chunk
            pl.BlockSpec((1, d_model_p), lambda i, k: (0, 0)),       # b2
        ]
        out_specs = pl.BlockSpec((tile_m, d_model_p), lambda i, k: (i, 0))
        scratch_shapes = (pltpu.VMEM((tile_m, d_model_p), jnp.float32),)
        dim_sem = ("parallel", "arbitrary")

    out2d = pl.pallas_call(
        kernel,
        out_shape=jax.ShapeDtypeStruct((M_pad, d_model_p), out_dtype),
        grid=grid,
        in_specs=in_specs,
        out_specs=out_specs,
        scratch_shapes=scratch_shapes,
        compiler_params=pltpu.CompilerParams(
            dimension_semantics=dim_sem,
            vmem_limit_bytes=vmem_limit,
        ),
        cost_estimate=cost,
    )(x2d, w1c, b1c, w2c, b2c)

    if M_pad != M or d_model_p != d_model:
        out2d = out2d[:M, :d_model]
    return out2d.reshape(B, S, d_model)


def init_params(key, d_model, d_ff, dtype=jnp.float32):
    """Deterministic init mimicking nn.Linear default (uniform ±1/sqrt(fan_in))."""
    k1, k2, k3, k4 = jax.random.split(key, 4)
    lim1 = 1.0 / jnp.sqrt(d_model)
    lim2 = 1.0 / jnp.sqrt(d_ff)
    w1 = jax.random.uniform(k1, (d_model, d_ff), dtype, -lim1, lim1)
    b1 = jax.random.uniform(k2, (d_ff,), dtype, -lim1, lim1)
    w2 = jax.random.uniform(k3, (d_ff, d_model), dtype, -lim2, lim2)
    b2 = jax.random.uniform(k4, (d_model,), dtype, -lim2, lim2)
    return w1, b1, w2, b2


if __name__ == "__main__":
    d_model, d_ff = 64, 256
    batch, seq = 2, 8

    key = jax.random.PRNGKey(0)
    kx, kp = jax.random.split(key)
    x = jax.random.normal(kx, (batch, seq, d_model), jnp.float32)
    w1, b1, w2, b2 = init_params(kp, d_model, d_ff)

    # Pure-JAX reference (eval mode => dropout is identity).
    ref = jnp.maximum(x.reshape(-1, d_model) @ w1 + b1, 0.0) @ w2 + b2
    ref = ref.reshape(batch, seq, d_model)

    # 1) f32-operand fast path (weights resident) -- tight check.
    out_f32 = positionwise_feed_forward(x, w1, b1, w2, b2,
                                        mxu_dtype=jnp.float32)
    out_f32 = jax.block_until_ready(out_f32)
    assert out_f32.shape == (batch, seq, d_model)
    assert jnp.allclose(out_f32, ref, atol=2e-4, rtol=2e-4), \
        "f32 fast path mismatch vs reference"

    # 2) f32-operand reduction path (forced tile_ff < d_ff) -- tight check.
    out_red = positionwise_feed_forward(x, w1, b1, w2, b2,
                                        mxu_dtype=jnp.float32, tile_ff=128)
    out_red = jax.block_until_ready(out_red)
    assert jnp.allclose(out_red, ref, atol=2e-4, rtol=2e-4), \
        "f32 reduction path mismatch vs reference"

    # 3) default path: bf16 MXU operands, f32 accumulation -- mixed-precision tol.
    out_bf16 = positionwise_feed_forward(x, w1, b1, w2, b2)
    out_bf16 = jax.block_until_ready(out_bf16)
    assert jnp.allclose(out_bf16, ref, atol=5e-2, rtol=5e-2), \
        "bf16 path mismatch vs reference"

    print("KERNEL_OK")
</pallas_src>

<mosaic_0001>
module attributes {stable_mosaic.version = 11 : i64} {
  func.func @_ffn_resident_kernel(%arg0: i32, %arg1: memref<8x128xf32, #tpu.memory_space<vmem>>, %arg2: memref<128x256xf32, #tpu.memory_space<vmem>>, %arg3: memref<1x256xf32, #tpu.memory_space<vmem>>, %arg4: memref<256x128xf32, #tpu.memory_space<vmem>>, %arg5: memref<1x128xf32, #tpu.memory_space<vmem>>, %arg6: memref<8x128xf32, #tpu.memory_space<vmem>>) attributes {dimension_semantics = [#tpu.dimension_semantics<parallel>], iteration_bounds = array<i64: 2>, scalar_prefetch = 0 : i64, scratch_operands = 0 : i64, tpu.core_type = #tpu.core_type<tc>, window_params = [{transform_indices = @transform_0, window_bounds = array<i64: 8, 128>}, {pipeline_mode = #tpu.pipeline_mode<synchronous>, transform_indices = @transform_1, window_bounds = array<i64: 128, 256>}, {pipeline_mode = #tpu.pipeline_mode<synchronous>, transform_indices = @transform_2, window_bounds = array<i64: 1, 256>}, {pipeline_mode = #tpu.pipeline_mode<synchronous>, transform_indices = @transform_3, window_bounds = array<i64: 256, 128>}, {pipeline_mode = #tpu.pipeline_mode<synchronous>, transform_indices = @transform_4, window_bounds = array<i64: 1, 128>}, {transform_indices = @transform_5, window_bounds = array<i64: 8, 128>}]} {
    %c0 = arith.constant 0 : index
    %c0_0 = arith.constant 0 : index
    %0 = vector.load %arg1[%c0, %c0_0] : memref<8x128xf32, #tpu.memory_space<vmem>>, vector<8x128xf32>
    %c0_1 = arith.constant 0 : index
    %c0_2 = arith.constant 0 : index
    %1 = vector.load %arg2[%c0_1, %c0_2] : memref<128x256xf32, #tpu.memory_space<vmem>>, vector<128x256xf32>
    %cst = arith.constant dense<0.000000e+00> : vector<8x256xf32>
    %2 = tpu.matmul %0, %1, %cst {dimension_numbers = #tpu.dot_dimension_numbers<[1], [0], [0], [1], [0, 0, 1, 1], [], []>} : vector<8x128xf32>, vector<128x256xf32>, vector<8x256xf32> -> vector<8x256xf32>
    %c0_3 = arith.constant 0 : index
    %c0_4 = arith.constant 0 : index
    %3 = vector.load %arg3[%c0_3, %c0_4] : memref<1x256xf32, #tpu.memory_space<vmem>>, vector<1x256xf32>
    %4 = vector.broadcast %3 : vector<1x256xf32> to vector<8x256xf32>
    %5 = arith.addf %2, %4 : vector<8x256xf32>
    %cst_5 = arith.constant 0.000000e+00 : f32
    %6 = vector.broadcast %cst_5 : f32 to vector<8x256xf32>
    %7 = arith.maximumf %5, %6 : vector<8x256xf32>
    %c0_6 = arith.constant 0 : index
    %c0_7 = arith.constant 0 : index
    %8 = vector.load %arg4[%c0_6, %c0_7] : memref<256x128xf32, #tpu.memory_space<vmem>>, vector<256x128xf32>
    %cst_8 = arith.constant dense<0.000000e+00> : vector<8x128xf32>
    %9 = tpu.matmul %7, %8, %cst_8 {dimension_numbers = #tpu.dot_dimension_numbers<[1], [0], [0], [1], [0, 0, 1, 1], [], []>} : vector<8x256xf32>, vector<256x128xf32>, vector<8x128xf32> -> vector<8x128xf32>
    %c0_9 = arith.constant 0 : index
    %c0_10 = arith.constant 0 : index
    %10 = vector.load %arg5[%c0_9, %c0_10] : memref<1x128xf32, #tpu.memory_space<vmem>>, vector<1x128xf32>
    %11 = vector.broadcast %10 : vector<1x128xf32> to vector<8x128xf32>
    %12 = arith.addf %9, %11 : vector<8x128xf32>
    %c0_11 = arith.constant 0 : index
    %c0_12 = arith.constant 0 : index
    %13 = vector.load %arg6[%c0_11, %c0_12] : memref<8x128xf32, #tpu.memory_space<vmem>>, vector<8x128xf32>
    tpu.vector_store %arg6[%c0_11, %c0_12], %12 {strides = array<i32>} : memref<8x128xf32, #tpu.memory_space<vmem>>, vector<8x128xf32>,
    return
  }
  func.func @transform_0(%arg0: i32) -> (i32, i32) {
    %c0_i32 = arith.constant 0 : i32
    %c0_i32_0 = arith.constant 0 : i32
    return %arg0, %c0_i32 : i32, i32
  }
  func.func @transform_1(%arg0: i32) -> (i32, i32) {
    %c0_i32 = arith.constant 0 : i32
    %c0_i32_0 = arith.constant 0 : i32
    %c0_i32_1 = arith.constant 0 : i32
    return %c0_i32, %c0_i32_0 : i32, i32
  }
  func.func @transform_2(%arg0: i32) -> (i32, i32) {
    %c0_i32 = arith.constant 0 : i32
    %c0_i32_0 = arith.constant 0 : i32
    %c0_i32_1 = arith.constant 0 : i32
    return %c0_i32, %c0_i32_0 : i32, i32
  }
  func.func @transform_3(%arg0: i32) -> (i32, i32) {
    %c0_i32 = arith.constant 0 : i32
    %c0_i32_0 = arith.constant 0 : i32
    %c0_i32_1 = arith.constant 0 : i32
    return %c0_i32, %c0_i32_0 : i32, i32
  }
  func.func @transform_4(%arg0: i32) -> (i32, i32) {
    %c0_i32 = arith.constant 0 : i32
    %c0_i32_0 = arith.constant 0 : i32
    %c0_i32_1 = arith.constant 0 : i32
    return %c0_i32, %c0_i32_0 : i32, i32
  }
  func.func @transform_5(%arg0: i32) -> (i32, i32) {
    %c0_i32 = arith.constant 0 : i32
    %c0_i32_0 = arith.constant 0 : i32
    return %arg0, %c0_i32 : i32, i32
  }
}

</mosaic_0001>

<llo_original>
// kernel: tpu_custom_call.1
$region0: #{tpu_custom_call.1}
  #allocation0 [shape = 'u32[]', space=smem, size = 0x4, offset = 0x4, fixed_abs, tag = 'smem constant byte address 0x4 - core index']
  #allocation1 [shape = 'u32[72,128]{1,0:T(1,128)}', space=vmem, size = 0x9000, scoped, tag = 'internal scratch']
  %s0 = inlined_call_operand.hbm [shape: f32[16,128], index: 0, kind: input, shape index: {}]
  %s1 = inlined_call_operand.hbm [shape: f32[128,256], index: 1, kind: input, shape index: {}]
  %s2 = inlined_call_operand.hbm [shape: f32[1,256], index: 2, kind: input, shape index: {}]
  %s3 = inlined_call_operand.hbm [shape: f32[256,128], index: 3, kind: input, shape index: {}]
  %s4 = inlined_call_operand.vmem [shape: f32[1,128], index: 4, kind: input, shape index: {}]
  %s5 = inlined_call_operand.hbm [shape: f32[16,128], index: 5, kind: output, shape index: {}]
  %s6 = sld [smem:[#allocation0]]
  $region69: #{tpu_custom_call.1} parent=0
    _
  %s8 = ssub.s32 1, %s6
  %s9 = scalar_select 0, %s8, %s6
  $region1: #{tpu_custom_call.1} parent=0
    #allocation2 [shape = 'u8[8192]{0}', space=vmem, size = 0x2000, scoped, tag = 'input window, operand 0']
    #allocation3 [shape = 's32[2]{0}', space=sflag, size = 0x8, scoped, tag = 'scoped memory for tpu_custom_call.1']
    #allocation4 [shape = 's32[2]{0}', space=sflag, size = 0x8, scoped, tag = 'scoped memory for tpu_custom_call.1']
    #allocation5 [shape = 'u8[131072]{0}', space=vmem, size = 0x20000, scoped, tag = 'input window, operand 1, single buffered']
    #allocation6 [shape = 's32[1]{0}', space=sflag, size = 0x4, scoped, tag = 'scoped memory for tpu_custom_call.1']
    #allocation7 [shape = 'u8[1024]{0}', space=vmem, size = 0x400, scoped, tag = 'input window, operand 2, single buffered']
    #allocation8 [shape = 'u8[131072]{0}', space=vmem, size = 0x20000, scoped, tag = 'input window, operand 3, single buffered']
    #allocation9 [shape = 's32[1]{0}', space=sflag, size = 0x4, scoped, tag = 'scoped memory for tpu_custom_call.1']
    #allocation10 [shape = 'u8[8192]{0}', space=vmem, size = 0x2000, scoped, tag = 'output window, operand 0']
    %10 = vsyncpa [#allocation3], 0
    %s11 = scalar_lea.sflag [#allocation3], 1
    %12 = vsyncpa %s11, 0
    %13 = vsyncpa [#allocation6], 0
    %14 = vsyncpa [#allocation9], 0
    %15 = vsyncpa [#allocation4], 0
    %s16 = scalar_lea.sflag [#allocation4], 1
    %17 = vsyncpa %s16, 0
    loop: start=0, step=1, limit=4
    $region2: #{tpu_custom_call.1} parent=1 // loop_pre_header
      _
    $region3: #{tpu_custom_call.1} parent=1 // loop_header
      %s19 = sphi 0, %s23
      %p20 = scmp.ge.s32.totalorder %s19, 4
      %s29 = sphi 0, %s31
      %s32 = sphi 0, %s29
      %s33 = sphi 0, %s32
      %s49 = sphi 0, %s33
      %s53 = sphi 0, %s53
      %s55 = sphi 0, %s53
      %s56 = sphi 0, %s55
      %s70 = sphi 0, %s56
      %s74 = sphi 0, %s74
      %s76 = sphi 0, %s74
      %s77 = sphi 0, %s76
      %s91 = sphi 0, %s77
      %s95 = sphi 0, %s95
      %s97 = sphi 0, %s95
      %s98 = sphi 0, %s97
      %s112 = sphi 0, %s98
      %s116 = sphi 0, %s116
      %s118 = sphi 0, %s116
      %s119 = sphi 0, %s118
      %s133 = sphi 0, %s119
      %s139 = sphi 0, %s141
      %s142 = sphi 0, %s139
      %s143 = sphi 0, %s142
      %s159 = sphi 0, %s143
    $region4: #{tpu_custom_call.1} parent=1 // loop_header_branch
      %22 = sbr.rel (%p20) target = $region8
    $region5: #{tpu_custom_call.1} parent=1 // loop_body
      %s24 = ssub.s32 %s19, 1
      %s25 = ssub.s32 %s19, 2
      %s26 = sadd.s32 %s19, 1
      %s27 = ssub.s32 %s19, %s26
      %p28 = scmp.eq.s32.totalorder %s27, 0
      %s30 = sadd.s32 %s29, 1
      %s31 = scalar_select %p28, %s29, %s30
      %p34 = pneg %p28
      %p35 = scmp.eq.s32.totalorder %s19, 1
      %p36 = por %p34, %p35
      %p37 = scmp.ne.s32.totalorder %s29, %s32
      %p38 = scmp.eq.s32.totalorder %s19, 0
      %p39 = por %p37, %p38
      %p40 = scmp.ne.s32.totalorder %s29, %s32
      %p41 = scmp.eq.s32.totalorder %s24, 1
      %p42 = por %p40, %p41
      %p43 = scmp.ne.s32.totalorder %s32, %s33
      %p44 = scmp.eq.s32.totalorder %s24, 0
      %p45 = por %p43, %p44
      %p46 = scmp.ne.s32.totalorder %s32, %s33
      %p47 = scmp.eq.s32.totalorder %s25, 1
      %p48 = por %p46, %p47
      %p50 = scmp.ne.s32.totalorder %s33, %s49
      %p51 = scmp.eq.s32.totalorder %s25, 0
      %p52 = por %p50, %p51
      %s54 = sadd.s32 %s53, 1
      %p57 = scmp.eq.s32.totalorder %s19, 1
      %p58 = scmp.ne.s32.totalorder %s53, %s55
      %p59 = scmp.eq.s32.totalorder %s19, 0
      %p60 = por %p58, %p59
      %p61 = scmp.ne.s32.totalorder %s53, %s55
      %p62 = scmp.eq.s32.totalorder %s24, 1
      %p63 = por %p61, %p62
      %p64 = scmp.ne.s32.totalorder %s55, %s56
      %p65 = scmp.eq.s32.totalorder %s24, 0
      %p66 = por %p64, %p65
      %p67 = scmp.ne.s32.totalorder %s55, %s56
      %p68 = scmp.eq.s32.totalorder %s25, 1
      %p69 = por %p67, %p68
      %p71 = scmp.ne.s32.totalorder %s56, %s70
      %p72 = scmp.eq.s32.totalorder %s25, 0
      %p73 = por %p71, %p72
      %s75 = sadd.s32 %s74, 1
      %p78 = scmp.eq.s32.totalorder %s19, 1
      %p79 = scmp.ne.s32.totalorder %s74, %s76
      %p80 = scmp.eq.s32.totalorder %s19, 0
      %p81 = por %p79, %p80
      %p82 = scmp.ne.s32.totalorder %s74, %s76
      %p83 = scmp.eq.s32.totalorder %s24, 1
      %p84 = por %p82, %p83
      %p85 = scmp.ne.s32.totalorder %s76, %s77
      %p86 = scmp.eq.s32.totalorder %s24, 0
      %p87 = por %p85, %p86
      %p88 = scmp.ne.s32.totalorder %s76, %s77
      %p89 = scmp.eq.s32.totalorder %s25, 1
      %p90 = por %p88, %p89
      %p92 = scmp.ne.s32.totalorder %s77, %s91
      %p93 = scmp.eq.s32.totalorder %s25, 0
      %p94 = por %p92, %p93
      %s96 = sadd.s32 %s95, 1
      %p99 = scmp.eq.s32.totalorder %s19, 1
      %p100 = scmp.ne.s32.totalorder %s95, %s97
      %p101 = scmp.eq.s32.totalorder %s19, 0
      %p102 = por %p100, %p101
      %p103 = scmp.ne.s32.totalorder %s95, %s97
      %p104 = scmp.eq.s32.totalorder %s24, 1
      %p105 = por %p103, %p104
      %p106 = scmp.ne.s32.totalorder %s97, %s98
      %p107 = scmp.eq.s32.totalorder %s24, 0
      %p108 = por %p106, %p107
      %p109 = scmp.ne.s32.totalorder %s97, %s98
      %p110 = scmp.eq.s32.totalorder %s25, 1
      %p111 = por %p109, %p110
      %p113 = scmp.ne.s32.totalorder %s98, %s112
      %p114 = scmp.eq.s32.totalorder %s25, 0
      %p115 = por %p113, %p114
      %s117 = sadd.s32 %s116, 1
      %p120 = scmp.eq.s32.totalorder %s19, 1
      %p121 = scmp.ne.s32.totalorder %s116, %s118
      %p122 = scmp.eq.s32.totalorder %s19, 0
      %p123 = por %p121, %p122
      %p124 = scmp.ne.s32.totalorder %s116, %s118
      %p125 = scmp.eq.s32.totalorder %s24, 1
      %p126 = por %p124, %p125
      %p127 = scmp.ne.s32.totalorder %s118, %s119
      %p128 = scmp.eq.s32.totalorder %s24, 0
      %p129 = por %p127, %p128
      %p130 = scmp.ne.s32.totalorder %s118, %s119
      %p131 = scmp.eq.s32.totalorder %s25, 1
      %p132 = por %p130, %p131
      %p134 = scmp.ne.s32.totalorder %s119, %s133
      %p135 = scmp.eq.s32.totalorder %s25, 0
      %p136 = por %p134, %p135
      %s137 = ssub.s32 %s19, %s26
      %p138 = scmp.eq.s32.totalorder %s137, 0
      %s140 = sadd.s32 %s139, 1
      %s141 = scalar_select %p138, %s139, %s140
      %p144 = pneg %p138
      %p145 = scmp.eq.s32.totalorder %s19, 1
      %p146 = por %p144, %p145
      %p147 = scmp.ne.s32.totalorder %s139, %s142
      %p148 = scmp.eq.s32.totalorder %s19, 0
      %p149 = por %p147, %p148
      %p150 = scmp.ne.s32.totalorder %s139, %s142
      %p151 = scmp.eq.s32.totalorder %s24, 1
      %p152 = por %p150, %p151
      %p153 = scmp.ne.s32.totalorder %s142, %s143
      %p154 = scmp.eq.s32.totalorder %s24, 0
      %p155 = por %p153, %p154
      %p156 = scmp.ne.s32.totalorder %s142, %s143
      %p157 = scmp.eq.s32.totalorder %s25, 1
      %p158 = por %p156, %p157
      %p160 = scmp.ne.s32.totalorder %s143, %s159
      %p161 = scmp.eq.s32.totalorder %s25, 0
      %p162 = por %p160, %p161
      %p163 = scmp.le.s32.totalorder 1, %s19
      %p164 = scmp.lt.s32.totalorder %s19, 3
      %p165 = pnand %p163, %p164
      %p166 = pneg %p165
      // Predicated region
      $region9: #{tpu_custom_call.1} parent=5 // pred_check
        _
      $region10: #{tpu_custom_call.1} parent=5 // pred_check_branch
        %168 = sbr.rel (%p165) target = $region12
      $region11: #{tpu_custom_call.1} parent=5 // pred_region
        %s169 = ssub.s32 %s19, 1
        // Predicated region
        $region13: #{tpu_custom_call.1} parent=11 // pred_check
          %p170 = pneg %p66
        $region14: #{tpu_custom_call.1} parent=11 // pred_check_branch
          %172 = sbr.rel (%p170) target = $region16
        $region15: #{tpu_custom_call.1} parent=11 // pred_region
          %174 = vsyncadd [#allocation6], 0
          %s175 = sshll.u32 %s1, 4
          %s176 = int_to_ptr.hbm [resolvable:$true] %s175
          %s177 = sshll.u32 [#allocation5], 4
          %s178 = int_to_ptr.vmem [resolvable:$true] %s177
          %183 = dma.hbm_to_vmem [thread:$0]  %s176, 4096, %s178, [#allocation6], 256, 256, 16
        $region16: #{tpu_custom_call.1} parent=11 // pred_fallthru
          _
        // Predicated region
        $region17: #{tpu_custom_call.1} parent=11 // pred_check
          %p184 = pneg %p87
        $region18: #{tpu_custom_call.1} parent=11 // pred_check_branch
          %186 = sbr.rel (%p184) target = $region20
        $region19: #{tpu_custom_call.1} parent=11 // pred_region
          %188 = vsyncadd [#allocation6], 0
          %s190 = sshll.u32 %s2, 4
          %s191 = int_to_ptr.hbm [resolvable:$true] %s190
          %s192 = sshll.u32 [#allocation7], 4
          %s193 = int_to_ptr.vmem [resolvable:$true] %s192
          %195 = dma.hbm_to_vmem [thread:$0]  %s191, 32, %s193, [#allocation6]
        $region20: #{tpu_custom_call.1} parent=11 // pred_fallthru
          _
        // Predicated region
        $region21: #{tpu_custom_call.1} parent=11 // pred_check
          %p196 = pneg %p108
        $region22: #{tpu_custom_call.1} parent=11 // pred_check_branch
          %198 = sbr.rel (%p196) target = $region24
        $region23: #{tpu_custom_call.1} parent=11 // pred_region
          %200 = vsyncadd [#allocation9], 0
          %s201 = sshll.u32 %s3, 4
          %s202 = int_to_ptr.hbm [resolvable:$true] %s201
          %s203 = sshll.u32 [#allocation8], 4
          %s204 = int_to_ptr.vmem [resolvable:$true] %s203
          %209 = dma.hbm_to_vmem [thread:$0]  %s202, 4096, %s204, [#allocation9], 128, 128, 8
        $region24: #{tpu_custom_call.1} parent=11 // pred_fallthru
          _
        // Predicated region
        $region25: #{tpu_custom_call.1} parent=11 // pred_check
          %p210 = pneg %p129
        $region26: #{tpu_custom_call.1} parent=11 // pred_check_branch
          %212 = sbr.rel (%p210) target = $region28
        $region27: #{tpu_custom_call.1} parent=11 // pred_region
          _
        $region28: #{tpu_custom_call.1} parent=11 // pred_fallthru
          _
      $region12: #{tpu_custom_call.1} parent=5 // pred_fallthru
        _
      %p213 = scmp.lt.s32.totalorder %s19, 2
      // Predicated region
      $region29: #{tpu_custom_call.1} parent=5 // pred_check
        %p214 = pneg %p213
      $region30: #{tpu_custom_call.1} parent=5 // pred_check_branch
        %216 = sbr.rel (%p214) target = $region32
      $region31: #{tpu_custom_call.1} parent=5 // pred_region
        // Predicated region
        $region33: #{tpu_custom_call.1} parent=31 // pred_check
          %p217 = pneg %p39
        $region34: #{tpu_custom_call.1} parent=31 // pred_check_branch
          %219 = sbr.rel (%p217) target = $region36
        $region35: #{tpu_custom_call.1} parent=31 // pred_region
          %s220 = sand.u32 %s29, 1
          %s221 = scalar_lea.sflag [#allocation3], %s220
          %s222 = sand.u32 %s29, 1
          %s223 = smul.addr %s222, 8
          %s224 = scalar_lea.vmem [#allocation2], %s223
          %226 = vsyncadd %s221, 0
          %s227 = smul.addr %s19, 8
          %s228 = scalar_lea.hbm %s0, %s227
          %s230 = sshll.u32 %s228, 4
          %s231 = int_to_ptr.hbm [resolvable:$true] %s230
          %s232 = sshll.u32 %s224, 4
          %s233 = int_to_ptr.vmem [resolvable:$true] %s232
          %235 = dma.hbm_to_vmem [thread:$0]  %s231, 128, %s233, %s221
        $region36: #{tpu_custom_call.1} parent=31 // pred_fallthru
          _
      $region32: #{tpu_custom_call.1} parent=5 // pred_fallthru
        _
      %p236 = scmp.le.s32.totalorder 1, %s19
      %p237 = scmp.lt.s32.totalorder %s19, 3
      %p238 = pnand %p236, %p237
      %p239 = pneg %p238
      // Predicated region
      $region37: #{tpu_custom_call.1} parent=5 // pred_check
        _
      $region38: #{tpu_custom_call.1} parent=5 // pred_check_branch
        %241 = sbr.rel (%p238) target = $region40
      $region39: #{tpu_custom_call.1} parent=5 // pred_region
        %s242 = ssub.s32 %s19, 1
        %s243 = sand.u32 %s32, 1
        %s244 = scalar_lea.sflag [#allocation3], %s243
        %s245 = sand.u32 %s32, 1
        %s246 = smul.addr %s245, 8
        %s247 = scalar_lea.vmem [#allocation2], %s246
        // Predicated region
        $region41: #{tpu_custom_call.1} parent=39 // pred_check
          %p248 = pneg %p45
        $region42: #{tpu_custom_call.1} parent=39 // pred_check_branch
          %250 = sbr.rel (%p248) target = $region44
        $region43: #{tpu_custom_call.1} parent=39 // pred_region
          %252 = dma.done %s244, 128
        $region44: #{tpu_custom_call.1} parent=39 // pred_fallthru
          _
        // Predicated region
        $region45: #{tpu_custom_call.1} parent=39 // pred_check
          %p253 = pneg %p66
        $region46: #{tpu_custom_call.1} parent=39 // pred_check_branch
          %255 = sbr.rel (%p253) target = $region48
        $region47: #{tpu_custom_call.1} parent=39 // pred_region
          %257 = dma.done [#allocation6], 4096
        $region48: #{tpu_custom_call.1} parent=39 // pred_fallthru
          _
        // Predicated region
        $region49: #{tpu_custom_call.1} parent=39 // pred_check
          %p258 = pneg %p87
        $region50: #{tpu_custom_call.1} parent=39 // pred_check_branch
          %260 = sbr.rel (%p258) target = $region52
        $region51: #{tpu_custom_call.1} parent=39 // pred_region
          %262 = dma.done [#allocation6], 32
        $region52: #{tpu_custom_call.1} parent=39 // pred_fallthru
          _
        // Predicated region
        $region53: #{tpu_custom_call.1} parent=39 // pred_check
          %p263 = pneg %p108
        $region54: #{tpu_custom_call.1} parent=39 // pred_check_branch
          %265 = sbr.rel (%p263) target = $region56
        $region55: #{tpu_custom_call.1} parent=39 // pred_region
          %267 = dma.done [#allocation9], 4096
        $region56: #{tpu_custom_call.1} parent=39 // pred_fallthru
          _
        %s268 = sand.u32 %s32, 1
        %s269 = scalar_lea.sflag [#allocation3], %s268
        %s270 = sand.u32 %s32, 1
        %s271 = smul.addr %s270, 8
        %s272 = scalar_lea.vmem [#allocation2], %s271
        %p273 = pneg %p45
        %p274 = pneg %p42
        %p275 = pneg %p66
        %p276 = pneg %p63
        %p277 = pneg %p87
        %p278 = pneg %p84
        %p279 = pneg %p108
        %p280 = pneg %p105
        %p281 = pneg %p129
        %p282 = pneg %p126
        %p283 = pneg %p155
        %p284 = pneg %p152
        %s285 = sand.u32 %s142, 1
        %s286 = scalar_lea.sflag [#allocation4], %s285
        %s287 = sand.u32 %s142, 1
        %s288 = smul.addr %s287, 8
        %s289 = scalar_lea.vmem [#allocation10], %s288
        %v290 = vld [vmem:[%s247] sm:$0xff]
        %v291 = vld [vmem:[#allocation5] sm:$0xff]
        %v292 = vld [vmem:[#allocation5 + $0x8] sm:$0xff]
        %v293 = vld [vmem:[#allocation5 + $0x10] sm:$0xff]
        %v294 = vld [vmem:[#allocation5 + $0x18] sm:$0xff]
        %v295 = vld [vmem:[#allocation5 + $0x20] sm:$0xff]
        %v296 = vld [vmem:[#allocation5 + $0x28] sm:$0xff]
        %v297 = vld [vmem:[#allocation5 + $0x30] sm:$0xff]
        %v298 = vld [vmem:[#allocation5 + $0x38] sm:$0xff]
        %v299 = vld [vmem:[#allocation5 + $0x40] sm:$0xff]
        %v300 = vld [vmem:[#allocation5 + $0x48] sm:$0xff]
        %v301 = vld [vmem:[#allocation5 + $0x50] sm:$0xff]
        %v302 = vld [vmem:[#allocation5 + $0x58] sm:$0xff]
        %v303 = vld [vmem:[#allocation5 + $0x60] sm:$0xff]
        %v304 = vld [vmem:[#allocation5 + $0x68] sm:$0xff]
        %v305 = vld [vmem:[#allocation5 + $0x70] sm:$0xff]
        %v306 = vld [vmem:[#allocation5 + $0x78] sm:$0xff]
        %v307 = vld [vmem:[#allocation5 + $0x80] sm:$0xff]
        %v308 = vld [vmem:[#allocation5 + $0x88] sm:$0xff]
        %v309 = vld [vmem:[#allocation5 + $0x90] sm:$0xff]
        %v310 = vld [vmem:[#allocation5 + $0x98] sm:$0xff]
        %v311 = vld [vmem:[#allocation5 + $0xa0] sm:$0xff]
        %v312 = vld [vmem:[#allocation5 + $0xa8] sm:$0xff]
        %v313 = vld [vmem:[#allocation5 + $0xb0] sm:$0xff]
        %v314 = vld [vmem:[#allocation5 + $0xb8] sm:$0xff]
        %v315 = vld [vmem:[#allocation5 + $0xc0] sm:$0xff]
        %v316 = vld [vmem:[#allocation5 + $0xc8] sm:$0xff]
        %v317 = vld [vmem:[#allocation5 + $0xd0] sm:$0xff]
        %v318 = vld [vmem:[#allocation5 + $0xd8] sm:$0xff]
        %v319 = vld [vmem:[#allocation5 + $0xe0] sm:$0xff]
        %v320 = vld [vmem:[#allocation5 + $0xe8] sm:$0xff]
        %v321 = vld [vmem:[#allocation5 + $0xf0] sm:$0xff]
        %v322 = vld [vmem:[#allocation5 + $0xf8] sm:$0xff]
        %v323 = vld [vmem:[#allocation7] sm:$0x3]
        %v325 = vperm.slane %v323, 0
        %v326 = vperm.slane %v323, 1
        %329 = vmatpush.msra.mxu0 %v321
        %330 = vmatpush.msra.mxu0 %v319
        %331 = vmatpush.msra.mxu0 %v317
        %332 = vmatpush.msra.mxu0 %v315
        %333 = vmatpush.msra.mxu0 %v313
        %334 = vmatpush.msra.mxu0 %v311
        %335 = vmatpush.msra.mxu0 %v309
        %336 = vmatpush.msra.mxu0 %v307
        %337 = vmatpush.msra.mxu0 %v305
        %338 = vmatpush.msra.mxu0 %v303
        %339 = vmatpush.msra.mxu0 %v301
        %340 = vmatpush.msra.mxu0 %v299
        %341 = vmatpush.msra.mxu0 %v297
        %342 = vmatpush.msra.mxu0 %v295
        %343 = vmatpush.msra.mxu0 %v293
        %344 = vmatpush.msra.mxu0 %v291
        %345 = vmatmul.f32.gmra.mxu0 %v290
        %v346 = vpop.f32.mrf.mxu0
        %v347 = vadd.f32 %v325, %v346
        %348 = vdwg.mxu0
        %349 = vmatpush.msra.mxu0 %v322
        %350 = vmatpush.msra.mxu0 %v320
        %351 = vmatpush.msra.mxu0 %v318
        %352 = vmatpush.msra.mxu0 %v316
        %353 = vmatpush.msra.mxu0 %v314
        %354 = vmatpush.msra.mxu0 %v312
        %355 = vmatpush.msra.mxu0 %v310
        %356 = vmatpush.msra.mxu0 %v308
        %357 = vmatpush.msra.mxu0 %v306
        %358 = vmatpush.msra.mxu0 %v304
        %359 = vmatpush.msra.mxu0 %v302
        %360 = vmatpush.msra.mxu0 %v300
        %361 = vmatpush.msra.mxu0 %v298
        %362 = vmatpush.msra.mxu0 %v296
        %363 = vmatpush.msra.mxu0 %v294
        %364 = vmatpush.msra.mxu0 %v292
        %365 = vmatmul.f32.gmra.mxu0 %v290
        %v366 = vpop.f32.mrf.mxu0
        %v367 = vadd.f32 %v326, %v366
        %368 = vdwg.mxu0
        %v369 = vmax.f32 %v347, 0.0
        %v370 = vmax.f32 %v367, 0.0
        %v371 = vld [vmem:[#allocation8] sm:$0xff]
        %v372 = vld [vmem:[#allocation8 + $0x8] sm:$0xff]
        %v373 = vld [vmem:[#allocation8 + $0x10] sm:$0xff]
        %v374 = vld [vmem:[#allocation8 + $0x18] sm:$0xff]
        %v375 = vld [vmem:[#allocation8 + $0x20] sm:$0xff]
        %v376 = vld [vmem:[#allocation8 + $0x28] sm:$0xff]
        %v377 = vld [vmem:[#allocation8 + $0x30] sm:$0xff]
        %v378 = vld [vmem:[#allocation8 + $0x38] sm:$0xff]
        %v379 = vld [vmem:[#allocation8 + $0x40] sm:$0xff]
        %v380 = vld [vmem:[#allocation8 + $0x48] sm:$0xff]
        %v381 = vld [vmem:[#allocation8 + $0x50] sm:$0xff]
        %v382 = vld [vmem:[#allocation8 + $0x58] sm:$0xff]
        %v383 = vld [vmem:[#allocation8 + $0x60] sm:$0xff]
        %v384 = vld [vmem:[#allocation8 + $0x68] sm:$0xff]
        %v385 = vld [vmem:[#allocation8 + $0x70] sm:$0xff]
        %v386 = vld [vmem:[#allocation8 + $0x78] sm:$0xff]
        %v387 = vld [vmem:[#allocation8 + $0x80] sm:$0xff]
        %v388 = vld [vmem:[#allocation8 + $0x88] sm:$0xff]
        %v389 = vld [vmem:[#allocation8 + $0x90] sm:$0xff]
        %v390 = vld [vmem:[#allocation8 + $0x98] sm:$0xff]
        %v391 = vld [vmem:[#allocation8 + $0xa0] sm:$0xff]
        %v392 = vld [vmem:[#allocation8 + $0xa8] sm:$0xff]
        %v393 = vld [vmem:[#allocation8 + $0xb0] sm:$0xff]
        %v394 = vld [vmem:[#allocation8 + $0xb8] sm:$0xff]
        %v395 = vld [vmem:[#allocation8 + $0xc0] sm:$0xff]
        %v396 = vld [vmem:[#allocation8 + $0xc8] sm:$0xff]
        %v397 = vld [vmem:[#allocation8 + $0xd0] sm:$0xff]
        %v398 = vld [vmem:[#allocation8 + $0xd8] sm:$0xff]
        %v399 = vld [vmem:[#allocation8 + $0xe0] sm:$0xff]
        %v400 = vld [vmem:[#allocation8 + $0xe8] sm:$0xff]
        %v401 = vld [vmem:[#allocation8 + $0xf0] sm:$0xff]
        %v402 = vld [vmem:[#allocation8 + $0xf8] sm:$0xff]
        %v403 = vld [vmem:[%s4] sm:$0x1]
        %v405 = vperm.slane %v403, 0
        %407 = vmatpush.msra.mxu0 %v386
        %408 = vmatpush.msra.mxu0 %v385
        %409 = vmatpush.msra.mxu0 %v384
        %410 = vmatpush.msra.mxu0 %v383
        %411 = vmatpush.msra.mxu0 %v382
        %412 = vmatpush.msra.mxu0 %v381
        %413 = vmatpush.msra.mxu0 %v380
        %414 = vmatpush.msra.mxu0 %v379
        %415 = vmatpush.msra.mxu0 %v378
        %416 = vmatpush.msra.mxu0 %v377
        %417 = vmatpush.msra.mxu0 %v376
        %418 = vmatpush.msra.mxu0 %v375
        %419 = vmatpush.msra.mxu0 %v374
        %420 = vmatpush.msra.mxu0 %v373
        %421 = vmatpush.msra.mxu0 %v372
        %422 = vmatpush.msra.mxu0 %v371
        %423 = vmatmul.f32.gmra.mxu0 %v369
        %v424 = vpop.f32.mrf.mxu0
        %v425 = vadd.f32 %v405, %v424
        %426 = vdwg.mxu0
        %427 = vmatpush.msra.mxu0 %v402
        %428 = vmatpush.msra.mxu0 %v401
        %429 = vmatpush.msra.mxu0 %v400
        %430 = vmatpush.msra.mxu0 %v399
        %431 = vmatpush.msra.mxu0 %v398
        %432 = vmatpush.msra.mxu0 %v397
        %433 = vmatpush.msra.mxu0 %v396
        %434 = vmatpush.msra.mxu0 %v395
        %435 = vmatpush.msra.mxu0 %v394
        %436 = vmatpush.msra.mxu0 %v393
        %437 = vmatpush.msra.mxu0 %v392
        %438 = vmatpush.msra.mxu0 %v391
        %439 = vmatpush.msra.mxu0 %v390
        %440 = vmatpush.msra.mxu0 %v389
        %441 = vmatpush.msra.mxu0 %v388
        %442 = vmatpush.msra.mxu0 %v387
        %443 = vmatmul.f32.gmra.mxu0 %v370
        %v444 = vpop.f32.mrf.mxu0
        %v445 = vadd.f32 %v425, %v444
        %446 = vdwg.mxu0
        %447 = vst [vmem:[%s289] sm:$0xff] %v445
        %s448 = sand.u32 %s142, 1
        %s449 = scalar_lea.sflag [#allocation4], %s448
        %s450 = sand.u32 %s142, 1
        %s451 = smul.addr %s450, 8
        %s452 = scalar_lea.vmem [#allocation10], %s451
        // Predicated region
        $region57: #{tpu_custom_call.1} parent=39 // pred_check
          %p453 = pneg %p152
        $region58: #{tpu_custom_call.1} parent=39 // pred_check_branch
          %455 = sbr.rel (%p453) target = $region60
        $region59: #{tpu_custom_call.1} parent=39 // pred_region
          %457 = vsyncadd %s449, 0
          %s458 = smul.addr %s24, 8
          %s459 = scalar_lea.hbm %s5, %s458
          %s461 = sshll.u32 %s452, 4
          %s462 = int_to_ptr.vmem [resolvable:$true] %s461
          %s463 = sshll.u32 %s459, 4
          %s464 = int_to_ptr.hbm [resolvable:$true] %s463
          %466 = dma.vmem_to_hbm [thread:$0]  %s462, 128, %s464, %s449
        $region60: #{tpu_custom_call.1} parent=39 // pred_fallthru
          _
      $region40: #{tpu_custom_call.1} parent=5 // pred_fallthru
        _
      %p467 = scmp.le.s32.totalorder 2, %s19
      // Predicated region
      $region61: #{tpu_custom_call.1} parent=5 // pred_check
        %p468 = pneg %p467
      $region62: #{tpu_custom_call.1} parent=5 // pred_check_branch
        %470 = sbr.rel (%p468) target = $region64
      $region63: #{tpu_custom_call.1} parent=5 // pred_region
        %s471 = ssub.s32 %s19, 2
        // Predicated region
        $region65: #{tpu_custom_call.1} parent=63 // pred_check
          %p472 = pneg %p158
        $region66: #{tpu_custom_call.1} parent=63 // pred_check_branch
          %474 = sbr.rel (%p472) target = $region68
        $region67: #{tpu_custom_call.1} parent=63 // pred_region
          %s475 = sand.u32 %s143, 1
          %s476 = scalar_lea.sflag [#allocation4], %s475
          %s477 = sand.u32 %s143, 1
          %s478 = smul.addr %s477, 8
          %s479 = scalar_lea.vmem [#allocation10], %s478
          %481 = dma.done %s476, 128
        $region68: #{tpu_custom_call.1} parent=63 // pred_fallthru
          _
      $region64: #{tpu_custom_call.1} parent=5 // pred_fallthru
        _
    $region6: #{tpu_custom_call.1} parent=1 // loop_footer
      %s23 = sadd.s32 1, %s19
    $region7: #{tpu_custom_call.1} parent=1 // loop_footer_branch
      %18 = sbr.rel target = $region3
    $region8: #{tpu_custom_call.1} parent=1 // loop_exit
      _
    %482 = vsyncpa [#allocation3], 1
    %s483 = scalar_lea.sflag [#allocation3], 1
    %484 = vsyncpa %s483, 1
    %485 = vsyncpa [#allocation6], 1
    %486 = vsyncpa [#allocation9], 1
    %487 = vsyncpa [#allocation4], 1
    %s488 = scalar_lea.sflag [#allocation4], 1
    %489 = vsyncpa %s488, 1

</llo_original>
